<compile_context>
chip_gen: v7x
topology: tpu7x:2x2x1
jax: 0.10.0
libtpu: 0.0.40
codegen_flags: <defaults>
</compile_context>

<pallas_src>
import functools

import jax
import jax.numpy as jnp
from jax.experimental import pallas as pl
from jax.experimental.pallas import tpu as pltpu


# --------------------------------------------------------------------------
# helpers
# --------------------------------------------------------------------------
def _round_up(x, m):
    return ((x + m - 1) // m) * m


def _padded_bytes(shape, itemsize=4):
    """VMEM footprint of a block: last dim pads to 128 lanes, 2nd-last to 8."""
    s = list(shape)
    if len(s) >= 1:
        s[-1] = _round_up(int(s[-1]), 128)
    if len(s) >= 2:
        s[-2] = _round_up(int(s[-2]), 8)
    n = 1
    for d in s:
        n *= int(d)
    return n * itemsize


def _vmem_caps():
    """(tile budget, compiler vmem limit) derived from the chip's VMEM.

    v7x (64 MiB physical / TC) -> ~29 MiB budget, 48 MiB limit.
    v5e / v6e (128 MiB physical) -> 48 MiB budget, 96 MiB limit.
    """
    cap = 64 * 1024 * 1024
    try:
        info = pltpu.get_tpu_info()
        cap = int(getattr(info, "vmem_capacity_bytes", cap))
    except Exception:
        pass
    budget = min(int(cap * 0.45), 48 * 1024 * 1024)
    limit = min(int(cap * 0.75), 96 * 1024 * 1024)
    return budget, limit


def _plan_tiles(batch, seq_len, latent_dim, attention_dim, budget_bytes):
    """Pick (batch_tile, time_chunk, n_time_chunks, padded_time_total)."""
    # Time chunk: whole sequence when small; otherwise 512-step chunks
    # (multiple of 8; a ragged last chunk is masked inside the kernel).
    t_chunk = seq_len if seq_len <= 512 else 512
    n_chunks = -(-seq_len // t_chunk)
    t_total = n_chunks * t_chunk

    def usage(bb):
        u = 0
        u += 2 * _padded_bytes((bb, t_chunk, latent_dim))    # latent (dbl-buffered)
        u += 2 * _padded_bytes((bb, attention_dim))          # hidden_att
        u += 2 * _padded_bytes((latent_dim, attention_dim))  # Wl
        u += 2 * _padded_bytes((1, attention_dim))           # Wj row
        u += 2 * _padded_bytes((bb, seq_len))                # output block
        u += _padded_bytes((bb, t_total))                    # joint scratch
        # live in-kernel intermediates (latent_att and relu(...)):
        u += 2 * bb * _padded_bytes((t_chunk, attention_dim))
        return u

    # Candidate batch tiles: full batch, or multiples of 8 (tiling rule for the
    # second-to-last dim of the (bb, T) / (bb, A) blocks).
    candidates = {batch}
    candidates.update(range(8, batch + 1, 8))
    # Prefer >= 2 batch tiles (2-TensorCore parts) when the batch allows it.
    cap = batch
    if batch >= 16:
        cap = max(8, ((-(-batch // 2)) // 8) * 8)

    best_div, best_any = None, None
    for bb in sorted(candidates, reverse=True):
        if batch >= 16 and bb > cap:
            continue
        if usage(bb) <= budget_bytes:
            if best_any is None:
                best_any = bb
            if batch % bb == 0:
                best_div = bb
                break
    best = best_div if best_div is not None else best_any

    if best is None:
        # Nothing fits: fall back to the smallest batch tile and shrink the
        # time chunk until it (roughly) fits.
        best = min(batch, 8)
        while t_chunk > 8 and usage(best) > budget_bytes:
            t_chunk = max(8, ((t_chunk // 2) // 8) * 8)
            n_chunks = -(-seq_len // t_chunk)
            t_total = n_chunks * t_chunk

    return best, t_chunk, n_chunks, t_total


# --------------------------------------------------------------------------
# kernel
# --------------------------------------------------------------------------
def _attention_kernel(hidden_ref, latent_ref, wl_ref, wj_ref, bj_ref,
                      out_ref, joint_ref, *, seq_len, t_chunk, n_chunks):
    bb, tt, latent_dim = latent_ref.shape
    attention_dim = wl_ref.shape[1]
    j = pl.program_id(1)

    # One tall 2-D MXU matmul over the flattened (batch_tile * time_chunk) rows.
    latent2d = latent_ref[...].reshape(bb * tt, latent_dim)
    latent_att = jnp.dot(latent2d, wl_ref[...],
                         preferred_element_type=jnp.float32)
    latent_att = latent_att.reshape(bb, tt, attention_dim)

    # T-invariant hidden projection (+ folded bl + bh) precomputed on the host.
    hidden_att = hidden_ref[...].astype(jnp.float32)[:, None, :]       # (bb,1,A)
    s = jnp.maximum(latent_att + hidden_att, 0.0)                      # (bb,tt,A)

    # joint_attention (A -> 1) as multiply + lane reduction -> (bb, tt);
    # bj is a scalar read from SMEM (kept for fidelity with the module).
    wj_row = wj_ref[...].reshape(1, 1, attention_dim)
    joint = jnp.sum(s * wj_row, axis=-1) + bj_ref[0]                   # (bb,tt)

    # Mask time positions past the true sequence length (ragged last chunk).
    if n_chunks * t_chunk != seq_len:
        col = j * t_chunk + jax.lax.broadcasted_iota(jnp.int32, (bb, tt), 1)
        joint = jnp.where(col < seq_len, joint, -1e30)

    def _finalize(scores):
        m = jnp.max(scores, axis=-1, keepdims=True)
        e = jnp.exp(scores - m)
        probs = e / jnp.sum(e, axis=-1, keepdims=True)                 # exact divide
        out_ref[...] = probs[:, :seq_len].astype(out_ref.dtype)

    if n_chunks == 1:
        # Single time chunk: softmax + lane store directly, scratch untouched.
        _finalize(joint)
    else:
        joint_ref[:, pl.ds(j * t_chunk, tt)] = joint

        @pl.when(j == n_chunks - 1)
        def _():
            _finalize(joint_ref[...])


# --------------------------------------------------------------------------
# wrapper
# --------------------------------------------------------------------------
def init_attention_params(key, latent_dim, hidden_dim, attention_dim):
    """Deterministic parameter init (shapes follow the nn.Linear layers)."""
    ks = jax.random.split(key, 6)
    scale_l = 1.0 / jnp.sqrt(latent_dim)
    scale_h = 1.0 / jnp.sqrt(hidden_dim)
    scale_j = 1.0 / jnp.sqrt(attention_dim)
    return dict(
        # stored as (in_features, out_features) => x @ W
        wl=jax.random.uniform(ks[0], (latent_dim, attention_dim), jnp.float32,
                              -scale_l, scale_l),
        bl=jax.random.uniform(ks[1], (1, attention_dim), jnp.float32,
                              -scale_l, scale_l),
        wh=jax.random.uniform(ks[2], (hidden_dim, attention_dim), jnp.float32,
                              -scale_h, scale_h),
        bh=jax.random.uniform(ks[3], (1, attention_dim), jnp.float32,
                              -scale_h, scale_h),
        wj=jax.random.uniform(ks[4], (attention_dim, 1), jnp.float32,
                              -scale_j, scale_j),
        bj=jax.random.uniform(ks[5], (1, 1), jnp.float32,
                              -scale_j, scale_j),
    )


def attention_forward(params, latent_repr, hidden_repr=None):
    """Pallas implementation of Attention.forward.

    latent_repr: (B, T, latent_dim) float
    hidden_repr: None, or list/tuple whose first element h_t is (B, 1, hidden_dim)
    returns: attention weights (B, T) float32
    """
    B, T, latent_dim = latent_repr.shape
    hidden_dim, attention_dim = params["wh"].shape

    # Host-side (tiny): T-invariant hidden projection with both biases folded.
    bias = (params["bl"] + params["bh"]).reshape(1, attention_dim).astype(jnp.float32)
    if hidden_repr is None:
        hidden_att = jnp.broadcast_to(bias, (B, attention_dim))
    else:
        h_t = hidden_repr[0].reshape(B, hidden_dim).astype(jnp.float32)
        hidden_att = h_t @ params["wh"].astype(jnp.float32) + bias      # (B, A)

    wl = params["wl"].astype(jnp.float32)                               # (L, A)
    wj_row = params["wj"].reshape(1, attention_dim).astype(jnp.float32)  # (1, A)
    bj = params["bj"].reshape(1).astype(jnp.float32)                    # SMEM scalar

    budget, vmem_limit = _vmem_caps()
    bb, t_chunk, n_chunks, t_total = _plan_tiles(
        B, T, latent_dim, attention_dim, budget)
    grid = (-(-B // bb), n_chunks)

    kernel = functools.partial(_attention_kernel, seq_len=T,
                               t_chunk=t_chunk, n_chunks=n_chunks)

    flops = 2 * B * T * latent_dim * attention_dim + 3 * B * T * attention_dim
    bytes_accessed = (latent_repr.dtype.itemsize * B * T * latent_dim
                      + 4 * (B * attention_dim + latent_dim * attention_dim
                             + attention_dim + 1 + B * T))

    out = pl.pallas_call(
        kernel,
        out_shape=jax.ShapeDtypeStruct((B, T), jnp.float32),
        grid=grid,
        in_specs=[
            pl.BlockSpec((bb, attention_dim), lambda i, j: (i, 0)),           # hidden_att
            pl.BlockSpec((bb, t_chunk, latent_dim), lambda i, j: (i, j, 0)),  # latent
            pl.BlockSpec((latent_dim, attention_dim), lambda i, j: (0, 0)),   # Wl
            pl.BlockSpec((1, attention_dim), lambda i, j: (0, 0)),            # Wj row
            pl.BlockSpec(memory_space=pltpu.MemorySpace.SMEM),                # bj scalar
        ],
        out_specs=pl.BlockSpec((bb, T), lambda i, j: (i, 0)),
        scratch_shapes=[pltpu.VMEM((bb, t_total), jnp.float32)],              # joint acc
        compiler_params=pltpu.CompilerParams(
            dimension_semantics=("parallel", "arbitrary"),
            vmem_limit_bytes=vmem_limit,
        ),
        cost_estimate=pl.CostEstimate(flops=flops, transcendentals=B * T,
                                      bytes_accessed=bytes_accessed),
    )(hidden_att, latent_repr, wl, wj_row, bj)

    return out


def _reference_forward(params, latent_repr, h_t):
    latent_att = latent_repr @ params["wl"] + params["bl"][None]
    hidden_att = h_t @ params["wh"] + params["bh"][None]
    s = jnp.maximum(latent_att + hidden_att, 0.0)
    joint = (s @ params["wj"] + params["bj"][None]).squeeze(-1)
    return jax.nn.softmax(joint, axis=-1)


if __name__ == "__main__":
    key = jax.random.PRNGKey(0)

    # Config 1: the small shapes implied by the module.
    B, T = 2, 8
    latent_dim, hidden_dim, attention_dim = 32, 32, 32
    k_param, k_lat, k_hid = jax.random.split(key, 3)
    params = init_attention_params(k_param, latent_dim, hidden_dim, attention_dim)
    latent_repr = jax.random.normal(k_lat, (B, T, latent_dim), jnp.float32)
    h_t = jax.random.normal(k_hid, (B, 1, hidden_dim), jnp.float32)
    hidden_repr = [h_t]   # mimics the PyTorch list convention (hidden_repr[0])

    out = attention_forward(params, latent_repr, hidden_repr)
    jax.block_until_ready(out)
    ref = _reference_forward(params, latent_repr, h_t)
    assert out.shape == (B, T)
    assert jnp.allclose(out, ref, atol=2e-3, rtol=2e-3)
    # exact division in the softmax epilogue -> tight row sums
    assert jnp.allclose(jnp.sum(out, axis=-1), jnp.ones((B,)), atol=1e-4)

    # Config 2: T not a multiple of 128 (masked output store, no host padding)
    # and the hidden_repr=None default path.
    B2, T2 = 4, 130
    ld2, hd2, ad2 = 48, 24, 64
    k_param2, k_lat2 = jax.random.split(jax.random.PRNGKey(1), 2)
    params2 = init_attention_params(k_param2, ld2, hd2, ad2)
    latent2 = jax.random.normal(k_lat2, (B2, T2, ld2), jnp.float32)
    out2 = attention_forward(params2, latent2, None)
    jax.block_until_ready(out2)
    ref2 = _reference_forward(params2, latent2, jnp.zeros((B2, 1, hd2), jnp.float32))
    assert out2.shape == (B2, T2)
    assert jnp.allclose(out2, ref2, atol=2e-3, rtol=2e-3)
    assert jnp.allclose(jnp.sum(out2, axis=-1), jnp.ones((B2,)), atol=1e-4)

    print("KERNEL_OK")
</pallas_src>

<mosaic_0001>
module attributes {stable_mosaic.version = 11 : i64} {
  func.func @_attention_kernel(%arg0: i32, %arg1: i32, %arg2: memref<2x32xf32, #tpu.memory_space<vmem>>, %arg3: memref<2x8x32xf32, #tpu.memory_space<vmem>>, %arg4: memref<32x32xf32, #tpu.memory_space<vmem>>, %arg5: memref<1x32xf32, #tpu.memory_space<vmem>>, %arg6: memref<1xf32, #tpu.memory_space<smem>>, %arg7: memref<2x8xf32, #tpu.memory_space<vmem>>, %arg8: memref<2x8xf32, #tpu.memory_space<vmem>>) attributes {dimension_semantics = [#tpu.dimension_semantics<parallel>, #tpu.dimension_semantics<arbitrary>], iteration_bounds = array<i64: 1, 1>, scalar_prefetch = 0 : i64, scratch_operands = 1 : i64, tpu.core_type = #tpu.core_type<tc>, window_params = [{transform_indices = @transform_0, window_bounds = array<i64: 2, 32>}, {transform_indices = @transform_1, window_bounds = array<i64: 2, 8, 32>}, {pipeline_mode = #tpu.pipeline_mode<synchronous>, transform_indices = @transform_2, window_bounds = array<i64: 32, 32>}, {pipeline_mode = #tpu.pipeline_mode<synchronous>, transform_indices = @transform_3, window_bounds = array<i64: 1, 32>}, {transform_indices = @transform_4, window_bounds = array<i64: 1>}, {transform_indices = @transform_5, window_bounds = array<i64: 2, 8>}]} {
    %c0 = arith.constant 0 : index
    %c0_0 = arith.constant 0 : index
    %c0_1 = arith.constant 0 : index
    %0 = vector.load %arg3[%c0, %c0_0, %c0_1] : memref<2x8x32xf32, #tpu.memory_space<vmem>>, vector<2x8x32xf32>
    %1 = vector.shape_cast %0 : vector<2x8x32xf32> to vector<16x32xf32>
    %c0_2 = arith.constant 0 : index
    %c0_3 = arith.constant 0 : index
    %2 = vector.load %arg4[%c0_2, %c0_3] : memref<32x32xf32, #tpu.memory_space<vmem>>, vector<32x32xf32>
    %cst = arith.constant dense<0.000000e+00> : vector<16x32xf32>
    %3 = tpu.matmul %1, %2, %cst {dimension_numbers = #tpu.dot_dimension_numbers<[1], [0], [0], [1], [0, 0, 1, 1], [], []>} : vector<16x32xf32>, vector<32x32xf32>, vector<16x32xf32> -> vector<16x32xf32>
    %4 = vector.shape_cast %3 : vector<16x32xf32> to vector<2x8x32xf32>
    %c0_4 = arith.constant 0 : index
    %c0_5 = arith.constant 0 : index
    %5 = vector.load %arg2[%c0_4, %c0_5] : memref<2x32xf32, #tpu.memory_space<vmem>>, vector<2x32xf32>
    %6 = vector.shape_cast %5 : vector<2x32xf32> to vector<2x1x32xf32>
    %7 = vector.broadcast %6 : vector<2x1x32xf32> to vector<2x8x32xf32>
    %8 = arith.addf %4, %7 : vector<2x8x32xf32>
    %cst_6 = arith.constant 0.000000e+00 : f32
    %9 = vector.broadcast %cst_6 : f32 to vector<2x8x32xf32>
    %10 = arith.maximumf %8, %9 : vector<2x8x32xf32>
    %c0_7 = arith.constant 0 : index
    %c0_8 = arith.constant 0 : index
    %11 = vector.load %arg5[%c0_7, %c0_8] : memref<1x32xf32, #tpu.memory_space<vmem>>, vector<1x32xf32>
    %12 = vector.shape_cast %11 : vector<1x32xf32> to vector<1x1x32xf32>
    %13 = vector.broadcast %12 : vector<1x1x32xf32> to vector<2x8x32xf32>
    %14 = arith.mulf %10, %13 : vector<2x8x32xf32>
    %cst_9 = arith.constant dense<0.000000e+00> : vector<2x8xf32>
    %15 = vector.multi_reduction <add>, %14, %cst_9 [2] : vector<2x8x32xf32> to vector<2x8xf32>
    %c0_10 = arith.constant 0 : index
    %16 = memref.load %arg6[%c0_10] : memref<1xf32, #tpu.memory_space<smem>>
    %17 = vector.broadcast %16 : f32 to vector<2x8xf32>
    %18 = arith.addf %15, %17 : vector<2x8xf32>
    %cst_11 = arith.constant dense<0xFF800000> : vector<2xf32>
    %19 = vector.multi_reduction <maximumf>, %18, %cst_11 [1] : vector<2x8xf32> to vector<2xf32>
    %20 = vector.shape_cast %19 : vector<2xf32> to vector<2x1xf32>
    %21 = vector.broadcast %20 : vector<2x1xf32> to vector<2x8xf32>
    %22 = arith.subf %18, %21 : vector<2x8xf32>
    %23 = math.exp %22 : vector<2x8xf32>
    %cst_12 = arith.constant dense<0.000000e+00> : vector<2xf32>
    %24 = vector.multi_reduction <add>, %23, %cst_12 [1] : vector<2x8xf32> to vector<2xf32>
    %25 = vector.shape_cast %24 : vector<2xf32> to vector<2x1xf32>
    %26 = vector.broadcast %25 : vector<2x1xf32> to vector<2x8xf32>
    %27 = arith.divf %23, %26 : vector<2x8xf32>
    %c0_13 = arith.constant 0 : index
    %c0_14 = arith.constant 0 : index
    %28 = vector.load %arg7[%c0_13, %c0_14] : memref<2x8xf32, #tpu.memory_space<vmem>>, vector<2x8xf32>
    tpu.vector_store %arg7[%c0_13, %c0_14], %27 {strides = array<i32>} : memref<2x8xf32, #tpu.memory_space<vmem>>, vector<2x8xf32>,
    return
  }
  func.func @transform_0(%arg0: i32, %arg1: i32) -> (i32, i32) {
    %c0_i32 = arith.constant 0 : i32
    %c0_i32_0 = arith.constant 0 : i32
    return %arg0, %c0_i32 : i32, i32
  }
  func.func @transform_1(%arg0: i32, %arg1: i32) -> (i32, i32, i32) {
    %c0_i32 = arith.constant 0 : i32
    %c0_i32_0 = arith.constant 0 : i32
    return %arg0, %arg1, %c0_i32 : i32, i32, i32
  }
  func.func @transform_2(%arg0: i32, %arg1: i32) -> (i32, i32) {
    %c0_i32 = arith.constant 0 : i32
    %c0_i32_0 = arith.constant 0 : i32
    %c0_i32_1 = arith.constant 0 : i32
    return %c0_i32, %c0_i32_0 : i32, i32
  }
  func.func @transform_3(%arg0: i32, %arg1: i32) -> (i32, i32) {
    %c0_i32 = arith.constant 0 : i32
    %c0_i32_0 = arith.constant 0 : i32
    %c0_i32_1 = arith.constant 0 : i32
    return %c0_i32, %c0_i32_0 : i32, i32
  }
  func.func @transform_4(%arg0: i32, %arg1: i32) -> i32 {
    %c0_i32 = arith.constant 0 : i32
    %c0_i32_0 = arith.constant 0 : i32
    return %c0_i32 : i32
  }
  func.func @transform_5(%arg0: i32, %arg1: i32) -> (i32, i32) {
    %c0_i32 = arith.constant 0 : i32
    %c0_i32_0 = arith.constant 0 : i32
    return %arg0, %c0_i32 : i32, i32
  }
}

</mosaic_0001>

<llo_original>
// kernel: tpu_custom_call.1
$region0: #{tpu_custom_call.1}
  #allocation0 [shape = 'u32[]', space=smem, size = 0x4, offset = 0x4, fixed_abs, tag = 'smem constant byte address 0x4 - core index']
  #allocation1 [shape = 'u32[144,128]{1,0:T(1,128)}', space=vmem, size = 0x12000, scoped, tag = 'internal scratch']
  #allocation2 [shape = 'f32[2,8]{1,0:T(2,128)}', space=vmem, size = 0x400, scoped, tag = 'scratch operand']
  #allocation3 [shape = 'f32[1]{0:T(128)S(6)}', space=smem, size = 0x200, scoped, tag = 'scoped memory for tpu_custom_call.1']
  %s0 = inlined_call_operand.vmem [shape: f32[2,32], index: 0, kind: input, shape index: {}]
  %s1 = inlined_call_operand.hbm [shape: f32[2,8,32], index: 1, kind: input, shape index: {}]
  %s2 = inlined_call_operand.hbm [shape: f32[32,32], index: 2, kind: input, shape index: {}]
  %s3 = inlined_call_operand.vmem [shape: f32[1,32], index: 3, kind: input, shape index: {}]
  %s4 = inlined_call_operand.<no memory space> [shape: f32[1], index: 4, kind: input, shape index: {}]
  %s5 = inlined_call_operand.hbm [shape: f32[2,8], index: 5, kind: output, shape index: {}]
  %s6 = sld [smem:[#allocation0]]
  $region38: #{tpu_custom_call.1} parent=0
    _
  %s8 = ssub.s32 1, %s6
  %s9 = scalar_select 0, %s8, %s6
  %10 = sst [smem:[#allocation3]] %s4
  $region1: #{tpu_custom_call.1} parent=0
    #allocation4 [shape = 'u8[8192]{0}', space=vmem, size = 0x2000, scoped, tag = 'input window, operand 1, single buffered']
    #allocation5 [shape = 's32[1]{0}', space=sflag, size = 0x4, scoped, tag = 'scoped memory for tpu_custom_call.1']
    #allocation6 [shape = 's32[1]{0}', space=sflag, size = 0x4, scoped, tag = 'scoped memory for tpu_custom_call.1']
    #allocation7 [shape = 'u8[16384]{0}', space=vmem, size = 0x4000, scoped, tag = 'input window, operand 2, single buffered']
    #allocation8 [shape = 's32[1]{0}', space=sflag, size = 0x4, scoped, tag = 'scoped memory for tpu_custom_call.1']
    #allocation9 [shape = 'u8[1024]{0}', space=vmem, size = 0x400, scoped, tag = 'output window, operand 0, single buffered']
    %11 = vsyncpa [#allocation5], 0
    %12 = vsyncpa [#allocation8], 0
    %13 = vsyncpa [#allocation6], 0
    // Predicated region
    $region2: #{tpu_custom_call.1} parent=1 // pred_check
      _
    $region3: #{tpu_custom_call.1} parent=1 // pred_check_branch
      %15 = sbr.rel (0) target = $region5
    $region4: #{tpu_custom_call.1} parent=1 // pred_region
      _
    $region5: #{tpu_custom_call.1} parent=1 // pred_fallthru
      _
    // Predicated region
    $region6: #{tpu_custom_call.1} parent=1 // pred_check
      _
    $region7: #{tpu_custom_call.1} parent=1 // pred_check_branch
      %17 = sbr.rel (0) target = $region9
    $region8: #{tpu_custom_call.1} parent=1 // pred_region
      %s19 = ssub.s32 256, 256
      %20 = vsyncadd [#allocation5], %s19
      %s21 = sshll.u32 [#allocation4], 4
      %s22 = int_to_ptr.vmem [resolvable:$true] %s21
      %27 = dma.hbm_to_vmem [thread:$0]  %s1, 256, %s22, [#allocation5], 128, 128, 8
    $region9: #{tpu_custom_call.1} parent=1 // pred_fallthru
      _
    // Predicated region
    $region10: #{tpu_custom_call.1} parent=1 // pred_check
      _
    $region11: #{tpu_custom_call.1} parent=1 // pred_check_branch
      %29 = sbr.rel (0) target = $region13
    $region12: #{tpu_custom_call.1} parent=1 // pred_region
      %s31 = ssub.s32 512, 512
      %32 = vsyncadd [#allocation8], %s31
      %s33 = sshll.u32 [#allocation7], 4
      %s34 = int_to_ptr.vmem [resolvable:$true] %s33
      %39 = dma.hbm_to_vmem [thread:$0]  %s2, 512, %s34, [#allocation8], 128, 128, 8
    $region13: #{tpu_custom_call.1} parent=1 // pred_fallthru
      _
    // Predicated region
    $region14: #{tpu_custom_call.1} parent=1 // pred_check
      _
    $region15: #{tpu_custom_call.1} parent=1 // pred_check_branch
      %41 = sbr.rel (0) target = $region17
    $region16: #{tpu_custom_call.1} parent=1 // pred_region
      _
    $region17: #{tpu_custom_call.1} parent=1 // pred_fallthru
      _
    // Predicated region
    $region18: #{tpu_custom_call.1} parent=1 // pred_check
      _
    $region19: #{tpu_custom_call.1} parent=1 // pred_check_branch
      %43 = sbr.rel (0) target = $region21
    $region20: #{tpu_custom_call.1} parent=1 // pred_region
      _
    $region21: #{tpu_custom_call.1} parent=1 // pred_fallthru
      _
    // Predicated region
    $region22: #{tpu_custom_call.1} parent=1 // pred_check
      _
    $region23: #{tpu_custom_call.1} parent=1 // pred_check_branch
      %45 = sbr.rel (0) target = $region25
    $region24: #{tpu_custom_call.1} parent=1 // pred_region
      %46 = dma.done [#allocation5], 256
    $region25: #{tpu_custom_call.1} parent=1 // pred_fallthru
      _
    // Predicated region
    $region26: #{tpu_custom_call.1} parent=1 // pred_check
      _
    $region27: #{tpu_custom_call.1} parent=1 // pred_check_branch
      %48 = sbr.rel (0) target = $region29
    $region28: #{tpu_custom_call.1} parent=1 // pred_region
      %49 = dma.done [#allocation8], 512
    $region29: #{tpu_custom_call.1} parent=1 // pred_fallthru
      _
    %v50 = vld [vmem:[#allocation4] sm:$0xff]
    %v51 = vld [vmem:[#allocation4 + $0x8] sm:$0xff]
    %v52 = vld [vmem:[#allocation7] sm:$0xff]
    %v53 = vld [vmem:[#allocation7 + $0x8] sm:$0xff]
    %v54 = vld [vmem:[#allocation7 + $0x10] sm:$0xff]
    %v55 = vld [vmem:[#allocation7 + $0x18] sm:$0xff]
    %vm56 = vcmask 261120
    %v58 = vsel %vm56, %v50, 0
    %v61 = vsel %vm56, %v51, 0
    %63 = vmatprep.subr.mxu0 0.0
    %64 = vmatpush1.msra.mxu0 %v52
    %65 = vmatprep.subr.mxu0 0.0
    %66 = vmatpush1.msra.mxu0 %v53
    %67 = vmatprep.subr.mxu0 0.0
    %68 = vmatpush1.msra.mxu0 %v54
    %69 = vmatprep.subr.mxu0 0.0
    %70 = vmatpush1.msra.mxu0 %v55
    %71 = vmatprep.subr.mxu0 0.0
    %72 = vmatpush1.msra.mxu0 0.0
    %73 = vmatprep.subr.mxu0 0.0
    %74 = vmatpush1.msra.mxu0 0.0
    %75 = vmatprep.subr.mxu0 0.0
    %76 = vmatpush1.msra.mxu0 0.0
    %77 = vmatprep.subr.mxu0 0.0
    %78 = vmatpush1.msra.mxu0 0.0
    %79 = vmatprep.subr.mxu0 0.0
    %80 = vmatpush1.msra.mxu0 0.0
    %81 = vmatprep.subr.mxu0 0.0
    %82 = vmatpush1.msra.mxu0 0.0
    %83 = vmatprep.subr.mxu0 0.0
    %84 = vmatpush1.msra.mxu0 0.0
    %85 = vmatprep.subr.mxu0 0.0
    %86 = vmatpush1.msra.mxu0 0.0
    %87 = vmatprep.subr.mxu0 0.0
    %88 = vmatpush1.msra.mxu0 0.0
    %89 = vmatprep.subr.mxu0 0.0
    %90 = vmatpush1.msra.mxu0 0.0
    %91 = vmatprep.subr.mxu0 0.0
    %92 = vmatpush1.msra.mxu0 0.0
    %93 = vmatprep.subr.mxu0 0.0
    %94 = vmatpush1.msra.mxu0 0.0
    %95 = vmatprep.subr.mxu0 0.0
    %96 = vmatpush1.msra.mxu0 0.0
    %97 = vmatprep.subr.mxu0 0.0
    %98 = vmatpush1.msra.mxu0 0.0
    %99 = vmatprep.subr.mxu0 0.0
    %100 = vmatpush1.msra.mxu0 0.0
    %101 = vmatprep.subr.mxu0 0.0
    %102 = vmatpush1.msra.mxu0 0.0
    %103 = vmatprep.subr.mxu0 0.0
    %104 = vmatpush1.msra.mxu0 0.0
    %105 = vmatprep.subr.mxu0 0.0
    %106 = vmatpush1.msra.mxu0 0.0
    %107 = vmatprep.subr.mxu0 0.0
    %108 = vmatpush1.msra.mxu0 0.0
    %109 = vmatprep.subr.mxu0 0.0
    %110 = vmatpush1.msra.mxu0 0.0
    %111 = vmatprep.subr.mxu0 0.0
    %112 = vmatpush1.msra.mxu0 0.0
    %113 = vmatprep.subr.mxu0 0.0
    %114 = vmatpush1.msra.mxu0 0.0
    %115 = vmatprep.subr.mxu0 0.0
    %116 = vmatpush1.msra.mxu0 0.0
    %117 = vmatprep.subr.mxu0 0.0
    %118 = vmatpush1.msra.mxu0 0.0
    %119 = vmatprep.subr.mxu0 0.0
    %120 = vmatpush1.msra.mxu0 0.0
    %121 = vmatprep.subr.mxu0 0.0
    %122 = vmatpush1.msra.mxu0 0.0
    %123 = vmatprep.subr.mxu0 0.0
    %124 = vmatpush1.msra.mxu0 0.0
    %125 = vmatprep.subr.mxu0 0.0
    %126 = vmatpush1.msra.mxu0 0.0
    %127 = vmatprep.mubr.f32.mxu0 0.0
    %128 = vmatmul.mubr.f32.gmra.mrb[0].mxu0 %v58
    %v129 = vpop.f32.mrb[0].mxu0
    %v130 = vadd.f32 0.0, %v129
    %v131 = vpop.f32.mrb[0].mxu0
    %132 = vmatprep.mubr.f32.mxu0 0.0
    %133 = vmatmul.mubr.f32.gmra.mrb[0].mxu0 %v61
    %v134 = vpop.f32.mrb[0].mxu0
    %v135 = vadd.f32 0.0, %v134
    %v136 = vpop.f32.mrb[0].mxu0
    %137 = vdwg.mxu0
    %v138 = vld [vmem:[%s0] sm:$0x3]
    %v141 = vunpack.c.l.s4 1966171168
    %v142 = vunpack.c.0.s8 %v141
    %v143 = vlaneseq
    %v144 = vshrl.u32 %v143, 7
    %v145 = vsub.s32 %v142, %v144
    %v146 = vrot.slane %v138, %v145
    %v147 = vcombine.high %v146, %v146
    %v149 = vunpack.c.l.s4 1966171168
    %v150 = vunpack.c.0.s8 %v149
    %v151 = vlaneseq
    %v152 = vshrl.u32 %v151, 7
    %v153 = vsub.s32 %v150, %v152
    %v154 = vrot.slane %v146, %v153
    %v156 = vunpack.c.l.s4 1966171168
    %v157 = vunpack.c.0.s8 %v156
    %v158 = vlaneseq
    %v159 = vshrl.u32 %v158, 7
    %v160 = vsub.s32 %v157, %v159
    %v161 = vrot.slane %v147, %v160
    %v162 = vlaneseq
    %v163 = vshrl.u32 %v162, 7
    %v164 = vsub.s32 0, %v163
    %v165 = vrot.slane %v154, %v164
    %v166 = vlaneseq
    %v167 = vshrl.u32 %v166, 7
    %v168 = vsub.s32 0, %v167
    %v169 = vrot.slane %v161, %v168
    %v172 = vadd.f32 %v130, %v165
    %v173 = vadd.f32 %v135, %v169
    %v174 = vmax.f32 %v172, 0.0
    %v175 = vmax.f32 %v173, 0.0
    %v176 = vld [vmem:[%s3] sm:$0x1]
    %v178 = vlaneseq
    %v179 = vshrl.u32 %v178, 7
    %v180 = vsub.s32 0, %v179
    %v181 = vrot.slane %v176, %v180
    %v183 = vmul.f32 %v174, %v181
    %v184 = vmul.f32 %v175, %v181
    %v185 = vsel %vm56, %v183, 0.0
    %186 = vadd.xlane.f32.xlu0 %v185
    %v187 = vpop.xlane.xlu0 %186
    %v188 = vsel %vm56, %v184, 0.0
    %189 = vadd.xlane.f32.xlu0 %v188
    %v190 = vpop.xlane.xlu0 %189
    %s191 = sld [smem:[#allocation3]]
    %v192 = vstv %s191
    %v193 = vadd.f32 %v187, %v192
    %v194 = vadd.f32 %v190, %v192
    %v197 = vlaneseq
    %v198 = vand.u32 %v197, 127
    %v199 = vlaneseq
    %v200 = vshrl.u32 %v199, 7
    %v201 = vsub.s32 %v198, %v200
    %v202 = vrot.slane %v193, %v201
    %v203 = vlaneseq
    %v204 = vshrl.u32 %v203, 7
    %v205 = vsub.s32 %v198, %v204
    %v206 = vrot.slane %v194, %v205
    %vm207 = vcmask 1041409
    %v208 = vsel %vm207, %v206, %v202
    %vm210 = vcmask 58368
    %v211 = vsel %vm210, %v208, -inf
    %212 = vmax.xlane.f32.xlu0 %v211
    %v213 = vpop.xlane.xlu0 %212
    %v215 = vlaneseq
    %v216 = vshrl.u32 %v215, 7
    %v217 = vsub.s32 0, %v216
    %v218 = vrot.slane %v213, %v217
    %v219 = vlaneseq
    %v220 = vshrl.u32 %v219, 7
    %v221 = vsub.s32 1, %v220
    %v222 = vrot.slane %v213, %v221
    %v225 = vsub.f32 %v193, %v218
    %v226 = vsub.f32 %v194, %v222
    %v227 = vmul.f32 %v225, 1.442695
    %v228 = vpow.pop %v227
    %v229 = vmul.f32 %v226, 1.442695
    %v230 = vpow.pop %v229
    %233 = vset.pattern.permute.xlu0 0
    %234 = vperm.xlu0 %233, %v228
    %v235 = vpop.permute.xlu0 %234
    %236 = vset.pattern.permute.xlu0 0
    %237 = vperm.xlu0 %236, %v230
    %v238 = vpop.permute.xlu0 %237
    %v239 = vlaneseq
    %v240 = vshrl.u32 %v239, 7
    %v241 = vsub.s32 %v198, %v240
    %v242 = vrot.slane %v235, %v241
    %v243 = vlaneseq
    %v244 = vshrl.u32 %v243, 7
    %v245 = vsub.s32 %v198, %v244
    %v246 = vrot.slane %v238, %v245
    %v247 = vsel %vm207, %v246, %v242
    %v249 = vsel %vm210, %v247, 0.0
    %250 = vadd.xlane.f32.xlu0 %v249
    %v251 = vpop.xlane.xlu0 %250
    %v253 = vlaneseq
    %v254 = vshrl.u32 %v253, 7
    %v255 = vsub.s32 0, %v254
    %v256 = vrot.slane %v251, %v255
    %v257 = vlaneseq
    %v258 = vshrl.u32 %v257, 7
    %v259 = vsub.s32 1, %v258
    %v260 = vrot.slane %v251, %v259
    %v263 = vrcp.pop %v256
    %v264 = vmul.f32 %v228, %v263
    %v265 = vrcp.pop %v260
    %v266 = vmul.f32 %v230, %v265
    %269 = vset.pattern.permute.xlu0 0
    %270 = vperm.xlu0 %269, %v264
    %v271 = vpop.permute.xlu0 %270
    %272 = vset.pattern.permute.xlu0 0
    %273 = vperm.xlu0 %272, %v266
    %v274 = vpop.permute.xlu0 %273
    %v275 = vlaneseq
    %v276 = vshrl.u32 %v275, 7
    %v277 = vsub.s32 %v198, %v276
    %v278 = vrot.slane %v271, %v277
    %v279 = vlaneseq
    %v280 = vshrl.u32 %v279, 7
    %v281 = vsub.s32 %v198, %v280
    %v282 = vrot.slane %v274, %v281
    %v283 = vsel %vm207, %v282, %v278
    %285 = vst.msk [vmem:[#allocation9] sm:$0x3] %vm210, %v283
    // Predicated region
    $region30: #{tpu_custom_call.1} parent=1 // pred_check
      _
    $region31: #{tpu_custom_call.1} parent=1 // pred_check_branch
      %287 = sbr.rel (0) target = $region33
    $region32: #{tpu_custom_call.1} parent=1 // pred_region
      %s289 = ssub.s32 32, 32
      %290 = vsyncadd [#allocation6], %s289
      %s292 = sshll.u32 [#allocation9], 4
      %s293 = int_to_ptr.vmem [resolvable:$true] %s292
      %295 = dma.vmem_to_hbm [thread:$0]  %s293, 32, %s5, [#allocation6]
    $region33: #{tpu_custom_call.1} parent=1 // pred_fallthru
      _
    // Predicated region
    $region34: #{tpu_custom_call.1} parent=1 // pred_check
      _
    $region35: #{tpu_custom_call.1} parent=1 // pred_check_branch
      %297 = sbr.rel (0) target = $region37
    $region36: #{tpu_custom_call.1} parent=1 // pred_region
      %298 = dma.done [#allocation6], 32
    $region37: #{tpu_custom_call.1} parent=1 // pred_fallthru
      _
    %299 = vsyncpa [#allocation5], 1
    %300 = vsyncpa [#allocation8], 1
    %301 = vsyncpa [#allocation6], 1

</llo_original>
